<compile_context>
chip_gen: v7x
topology: tpu7x:2x2x1
jax: 0.10.0
libtpu: 0.0.40
codegen_flags: <defaults>
</compile_context>

<pallas_src>
import functools

import jax
import jax.numpy as jnp
from jax import lax
from jax.experimental import pallas as pl
from jax.experimental.pallas import tpu as pltpu


def _round_up(x, m):
    return ((x + m - 1) // m) * m


def rnn_recurrence_kernel(ublk_ref, nvb_ref, u_ref, xlen_ref, whh_ref, h_ref,
                          *, unroll):
    """One (batch_block, time_block) grid step of the masked tanh recurrence.

    ublk_ref: (nB, nT) i32 SMEM  clamped u time-block index (index_map only)
    nvb_ref:  (nB,)    i32 SMEM  number of valid time blocks per batch block
    u_ref:    (TB, BB, Hpad)     pre-projected inputs u_t = emb(x_t)@W_ih + b
    xlen_ref: (BB, 1)  i32       valid lengths
    whh_ref:  (Hpad, Hpad)       recurrent weight (zero padded)
    h_ref:    (BB, Hpad) f32     output block == VMEM-carried hidden state
    """
    del ublk_ref  # consumed only by the u BlockSpec index_map
    bi = pl.program_id(0)
    ti = pl.program_id(1)
    tb = u_ref.shape[0]

    @pl.when(ti == 0)
    def _():
        h_ref[...] = jnp.zeros_like(h_ref)

    # Skip time blocks that lie fully beyond every sequence in this batch block.
    @pl.when(ti < nvb_ref[bi])
    def _():
        whh = whh_ref[...]            # loop-invariant loads hoisted
        xlen = xlen_ref[...]          # (BB, 1)
        t0 = ti * tb

        def step(k, h):
            u_t = u_ref[k]            # (BB, Hpad) dynamic index along axis 0
            # bf16 MXU operands, f32 accumulate; the h carry stays f32.
            # TODO(synk): verify in the bundle dump that Mosaic latches the
            # loop-invariant RHS (whh) instead of re-pushing it every step.
            pre = jnp.dot(h.astype(whh.dtype), whh,
                          preferred_element_type=jnp.float32) + u_t
            h_new = jnp.tanh(pre)
            mask = (t0 + k) < xlen    # (BB, 1) -> broadcast over Hpad
            return jnp.where(mask, h_new, h)

        h_ref[...] = lax.fori_loop(0, tb, step, h_ref[...], unroll=unroll)


def rnn_model_forward(input_ids, x_len, params, *, time_block=32,
                      num_batch_blocks=1, batch_block=None,
                      matmul_dtype=jnp.bfloat16, unroll=8):
    """input_ids: (B, T) int32, x_len: (B,) int32 -> logits (B, O) f32.

    num_batch_blocks: 1 for v5e/v6e (single TensorCore), 2 for v7x so the
    "parallel" batch axis lands one recurrence chain per TensorCore.
    """
    emb_table = params["emb_table"]          # (V+1, E), row 0 zeros (padding_idx)
    wih, whh, b = params["wih"], params["whh"], params["b"]
    wfc, bfc = params["wfc"], params["bfc"]

    B, T = input_ids.shape
    H = whh.shape[0]

    Hpad = _round_up(H, 128)
    sub = 16 if jnp.dtype(matmul_dtype).itemsize == 2 else 8
    if batch_block is None:
        BB = _round_up(pl.cdiv(B, num_batch_blocks), sub)
    else:
        BB = _round_up(batch_block, sub)
    Bpad = _round_up(B, BB)
    TB = max(1, min(time_block, T))
    Tpad = _round_up(T, TB)
    nB, nT = Bpad // BB, Tpad // TB

    hi = jax.lax.Precision.HIGHEST

    # Fold Embedding∘W_ih into one pre-projected table (exact linear fold),
    # gather it directly in time-major order, fold in the bias, then cast the
    # matmul/additive operands to bf16 (the carried state stays f32 in-kernel).
    # TODO(synk): for very large vocabularies move the gather in-kernel
    # (VMEM-resident (V+1, Hpad) table + per-block id gather) to cut the
    # (T, B, Hpad) HBM materialization down to 4 B/token of ids.
    u_table = jnp.dot(emb_table, wih, precision=hi)            # (V+1, H)
    u_table = jnp.pad(u_table, ((0, 0), (0, Hpad - H)))
    b_p = jnp.pad(b, ((0, 0), (0, Hpad - H)))
    u_seq = jnp.take(u_table, input_ids.T.astype(jnp.int32), axis=0) + b_p
    u_seq = u_seq.astype(matmul_dtype)                         # (T, B, Hpad)
    u_seq = jnp.pad(u_seq, ((0, Tpad - T), (0, Bpad - B), (0, 0)))

    whh_p = jnp.pad(whh, ((0, Hpad - H), (0, Hpad - H))).astype(matmul_dtype)

    xlen_pad = jnp.pad(x_len.astype(jnp.int32), (0, Bpad - B))  # pad rows: len 0
    xlen2d = xlen_pad.reshape(Bpad, 1)

    # Scalar-prefetch tables: per-batch-block valid time-block count and the
    # clamped u time-block index (so skipped blocks are not re-DMA'd).
    maxlen_blk = xlen_pad.reshape(nB, BB).max(axis=1)            # (nB,)
    nvb = ((maxlen_blk + TB - 1) // TB).astype(jnp.int32)
    lastb = jnp.maximum(nvb - 1, 0)
    ublk = jnp.minimum(jnp.arange(nT, dtype=jnp.int32)[None, :],
                       lastb[:, None]).astype(jnp.int32)        # (nB, nT)

    itm = jnp.dtype(matmul_dtype).itemsize
    est = (2 * TB * BB * Hpad * itm        # double-buffered u blocks
           + 2 * Hpad * Hpad * itm         # whh
           + 2 * BB * Hpad * 4             # carried h output block
           + 2 * BB * 128 * 4)             # xlen block (lane padded)
    vmem_limit = int(min(max(2 * est, 16 * 1024 * 1024), 64 * 1024 * 1024))

    kernel = functools.partial(rnn_recurrence_kernel,
                               unroll=max(1, min(unroll, TB)))

    h_final = pl.pallas_call(
        kernel,
        out_shape=jax.ShapeDtypeStruct((Bpad, Hpad), jnp.float32),
        grid_spec=pltpu.PrefetchScalarGridSpec(
            num_scalar_prefetch=2,
            grid=(nB, nT),                      # time innermost ("arbitrary")
            in_specs=[
                pl.BlockSpec((TB, BB, Hpad),
                             lambda bi, ti, ublk_r, nvb_r: (ublk_r[bi, ti], bi, 0)),
                pl.BlockSpec((BB, 1),
                             lambda bi, ti, ublk_r, nvb_r: (bi, 0)),
                pl.BlockSpec((Hpad, Hpad),
                             lambda bi, ti, ublk_r, nvb_r: (0, 0)),
            ],
            out_specs=pl.BlockSpec((BB, Hpad),
                                   lambda bi, ti, ublk_r, nvb_r: (bi, 0)),
        ),
        compiler_params=pltpu.CompilerParams(
            dimension_semantics=("parallel", "arbitrary"),
            vmem_limit_bytes=vmem_limit),
    )(ublk, nvb, u_seq, xlen2d, whh_p)

    # Final Linear (H -> O=1) in XLA: ~2*B*H FLOPs; keeps a lane-width-1
    # masked-store output path out of the kernel.
    return jnp.dot(h_final[:B, :H], wfc, precision=hi) + bfc


def reference_forward(input_ids, x_len, params):
    """Pure-JAX reference mirroring torch semantics (for a sanity check)."""
    emb_table = params["emb_table"]
    wih, whh, b = params["wih"], params["whh"], params["b"]
    wfc, bfc = params["wfc"], params["bfc"]
    B, T = input_ids.shape
    H = whh.shape[0]
    hi = jax.lax.Precision.HIGHEST
    emb = jnp.take(emb_table, input_ids, axis=0)             # (B, T, E)
    h = jnp.zeros((B, H), jnp.float32)
    for t in range(T):
        pre = (jnp.dot(emb[:, t, :], wih, precision=hi)
               + jnp.dot(h, whh, precision=hi) + b)
        h_new = jnp.tanh(pre)
        mask = (t < x_len).reshape(B, 1)
        h = jnp.where(mask, h_new, h)
    return jnp.dot(h, wfc, precision=hi) + bfc


if __name__ == "__main__":
    # Small, forward-consistent shapes.
    VOCAB = 50      # stands in for len(tokenizer.vocab)
    EMB = 128       # emb_dim (300 in the module; small here)
    HID = 32        # hidden_dim (50 in the module; small here)
    OUT = 1         # output_size
    B, T = 32, 12   # batch, max_seq_length

    key = jax.random.PRNGKey(0)
    (k_emb, k_wih, k_whh, k_bih, k_bhh, k_wfc, k_bfc, k_ids,
     k_len_hi, k_len_lo) = jax.random.split(key, 10)

    # Deterministic parameter init (shapes follow nn.Embedding / nn.RNN / nn.Linear).
    emb_table = 0.02 * jax.random.normal(k_emb, (VOCAB + 1, EMB), jnp.float32)
    emb_table = emb_table.at[0].set(0.0)                # padding_idx=0
    s_rnn = 1.0 / jnp.sqrt(HID)
    wih = jax.random.uniform(k_wih, (EMB, HID), jnp.float32, -s_rnn, s_rnn)
    whh = jax.random.uniform(k_whh, (HID, HID), jnp.float32, -s_rnn, s_rnn)
    b_ih = jax.random.uniform(k_bih, (1, HID), jnp.float32, -s_rnn, s_rnn)
    b_hh = jax.random.uniform(k_bhh, (1, HID), jnp.float32, -s_rnn, s_rnn)
    b = b_ih + b_hh
    s_fc = 1.0 / jnp.sqrt(HID)
    wfc = jax.random.uniform(k_wfc, (HID, OUT), jnp.float32, -s_fc, s_fc)
    bfc = jax.random.uniform(k_bfc, (1, OUT), jnp.float32, -s_fc, s_fc)

    params = dict(emb_table=emb_table, wih=wih, whh=whh, b=b, wfc=wfc, bfc=bfc)

    # Deterministic example inputs: padded ID tensor + valid lengths.
    # Second half of the batch gets short sequences so the per-block
    # time-block-skipping path is exercised when num_batch_blocks=2.
    x_len_hi = jax.random.randint(k_len_hi, (B // 2,), 1, T + 1)
    x_len_lo = jax.random.randint(k_len_lo, (B // 2,), 1, 5)
    x_len = jnp.concatenate([x_len_hi, x_len_lo]).astype(jnp.int32)
    input_ids = jax.random.randint(k_ids, (B, T), 1, VOCAB + 1).astype(jnp.int32)
    pad_mask = jnp.arange(T)[None, :] < x_len[:, None]
    input_ids = jnp.where(pad_mask, input_ids, 0)       # 0 = padding id

    ref = reference_forward(input_ids, x_len, params)

    # 1) Exact-precision path (f32 MXU operands), single batch block (v5e/v6e
    #    style), time_block=4 exercises the carried hidden state across blocks.
    out_f32 = rnn_model_forward(input_ids, x_len, params, time_block=4,
                                num_batch_blocks=1,
                                matmul_dtype=jnp.float32)
    out_f32 = jax.block_until_ready(out_f32)
    assert out_f32.shape == (B, OUT)
    assert jnp.allclose(out_f32, ref, atol=1e-4, rtol=1e-4), (
        f"f32 mismatch: {out_f32} vs {ref}")

    # 2) Default bf16-MXU path, two batch blocks (v7x megacore layout); also
    #    exercises the skipped-time-block / clamped-index_map path.
    out_bf16 = rnn_model_forward(input_ids, x_len, params, time_block=4,
                                 num_batch_blocks=2)
    out_bf16 = jax.block_until_ready(out_bf16)
    assert out_bf16.shape == (B, OUT)
    assert jnp.allclose(out_bf16, ref, atol=1e-2, rtol=1e-2), (
        f"bf16 mismatch: {out_bf16} vs {ref}")

    print("KERNEL_OK")
</pallas_src>

<mosaic_0001>
module attributes {stable_mosaic.version = 11 : i64} {
  func.func @rnn_recurrence_kernel(%arg0: i32, %arg1: i32, %arg2: memref<1x3xi32, #tpu.memory_space<smem>>, %arg3: memref<1xi32, #tpu.memory_space<smem>>, %arg4: memref<4x32x128xf32, #tpu.memory_space<vmem>>, %arg5: memref<32x1xi32, #tpu.memory_space<vmem>>, %arg6: memref<128x128xf32, #tpu.memory_space<vmem>>, %arg7: memref<32x128xf32, #tpu.memory_space<vmem>>) attributes {dimension_semantics = [#tpu.dimension_semantics<parallel>, #tpu.dimension_semantics<arbitrary>], iteration_bounds = array<i64: 1, 3>, scalar_prefetch = 2 : i64, scratch_operands = 0 : i64, tpu.core_type = #tpu.core_type<tc>, window_params = [{transform_indices = @transform_0, window_bounds = array<i64: 4, 32, 128>}, {transform_indices = @transform_1, window_bounds = array<i64: 32, 1>}, {pipeline_mode = #tpu.pipeline_mode<synchronous>, transform_indices = @transform_2, window_bounds = array<i64: 128, 128>}, {transform_indices = @transform_3, window_bounds = array<i64: 32, 128>}]} {
    %c0_i32 = arith.constant 0 : i32
    %0 = arith.cmpi eq, %arg1, %c0_i32 : i32
    %1 = arith.extui %0 : i1 to i32
    %c0_i32_0 = arith.constant 0 : i32
    %2 = arith.cmpi ne, %1, %c0_i32_0 : i32
    scf.if %2 {
      %cst = arith.constant 0.000000e+00 : f32
      %8 = vector.broadcast %cst : f32 to vector<32x128xf32>
      %c0 = arith.constant 0 : index
      %c0_2 = arith.constant 0 : index
      %9 = vector.load %arg7[%c0, %c0_2] : memref<32x128xf32, #tpu.memory_space<vmem>>, vector<32x128xf32>
      tpu.vector_store %arg7[%c0, %c0_2], %8 {strides = array<i32>} : memref<32x128xf32, #tpu.memory_space<vmem>>, vector<32x128xf32>,
    } else {
    }
    %3 = arith.index_cast %arg0 : i32 to index
    %4 = memref.load %arg3[%3] : memref<1xi32, #tpu.memory_space<smem>>
    %5 = arith.cmpi slt, %arg1, %4 : i32
    %6 = arith.extui %5 : i1 to i32
    %c0_i32_1 = arith.constant 0 : i32
    %7 = arith.cmpi ne, %6, %c0_i32_1 : i32
    scf.if %7 {
      %c0 = arith.constant 0 : index
      %c0_2 = arith.constant 0 : index
      %8 = vector.load %arg6[%c0, %c0_2] : memref<128x128xf32, #tpu.memory_space<vmem>>, vector<128x128xf32>
      %c0_3 = arith.constant 0 : index
      %c0_4 = arith.constant 0 : index
      %9 = vector.load %arg5[%c0_3, %c0_4] : memref<32x1xi32, #tpu.memory_space<vmem>>, vector<32x1xi32>
      %c4_i32 = arith.constant 4 : i32
      %10 = arith.muli %arg1, %c4_i32 : i32
      %c0_5 = arith.constant 0 : index
      %c0_6 = arith.constant 0 : index
      %11 = vector.load %arg7[%c0_5, %c0_6] : memref<32x128xf32, #tpu.memory_space<vmem>>, vector<32x128xf32>
      %c0_i32_7 = arith.constant 0 : i32
      %12 = arith.index_cast %c0_i32_7 : i32 to index
      %c0_8 = arith.constant 0 : index
      %c0_9 = arith.constant 0 : index
      %13 = vector.load %arg4[%12, %c0_8, %c0_9] : memref<4x32x128xf32, #tpu.memory_space<vmem>>, vector<1x32x128xf32>
      %14 = vector.shape_cast %13 : vector<1x32x128xf32> to vector<32x128xf32>
      %cst = arith.constant dense<0.000000e+00> : vector<32x128xf32>
      %15 = tpu.matmul %11, %8, %cst {dimension_numbers = #tpu.dot_dimension_numbers<[1], [0], [0], [1], [0, 0, 1, 1], [], []>} : vector<32x128xf32>, vector<128x128xf32>, vector<32x128xf32> -> vector<32x128xf32>
      %16 = arith.addf %15, %14 : vector<32x128xf32>
      %17 = math.tanh %16 : vector<32x128xf32>
      %18 = arith.addi %10, %c0_i32_7 : i32
      %19 = vector.broadcast %18 : i32 to vector<32x1xi32>
      %20 = arith.cmpi slt, %19, %9 : vector<32x1xi32>
      %21 = vector.shape_cast %20 : vector<32x1xi1> to vector<32x1xi1>
      %22 = vector.broadcast %21 : vector<32x1xi1> to vector<32x128xi1>
      %23 = arith.select %22, %17, %11 : vector<32x128xi1>, vector<32x128xf32>
      %c1_i32 = arith.constant 1 : i32
      %24 = arith.index_cast %c1_i32 : i32 to index
      %c0_10 = arith.constant 0 : index
      %c0_11 = arith.constant 0 : index
      %25 = vector.load %arg4[%24, %c0_10, %c0_11] : memref<4x32x128xf32, #tpu.memory_space<vmem>>, vector<1x32x128xf32>
      %26 = vector.shape_cast %25 : vector<1x32x128xf32> to vector<32x128xf32>
      %cst_12 = arith.constant dense<0.000000e+00> : vector<32x128xf32>
      %27 = tpu.matmul %23, %8, %cst_12 {dimension_numbers = #tpu.dot_dimension_numbers<[1], [0], [0], [1], [0, 0, 1, 1], [], []>} : vector<32x128xf32>, vector<128x128xf32>, vector<32x128xf32> -> vector<32x128xf32>
      %28 = arith.addf %27, %26 : vector<32x128xf32>
      %29 = math.tanh %28 : vector<32x128xf32>
      %30 = arith.addi %10, %c1_i32 : i32
      %31 = vector.broadcast %30 : i32 to vector<32x1xi32>
      %32 = arith.cmpi slt, %31, %9 : vector<32x1xi32>
      %33 = vector.shape_cast %32 : vector<32x1xi1> to vector<32x1xi1>
      %34 = vector.broadcast %33 : vector<32x1xi1> to vector<32x128xi1>
      %35 = arith.select %34, %29, %23 : vector<32x128xi1>, vector<32x128xf32>
      %c2_i32 = arith.constant 2 : i32
      %36 = arith.index_cast %c2_i32 : i32 to index
      %c0_13 = arith.constant 0 : index
      %c0_14 = arith.constant 0 : index
      %37 = vector.load %arg4[%36, %c0_13, %c0_14] : memref<4x32x128xf32, #tpu.memory_space<vmem>>, vector<1x32x128xf32>
      %38 = vector.shape_cast %37 : vector<1x32x128xf32> to vector<32x128xf32>
      %cst_15 = arith.constant dense<0.000000e+00> : vector<32x128xf32>
      %39 = tpu.matmul %35, %8, %cst_15 {dimension_numbers = #tpu.dot_dimension_numbers<[1], [0], [0], [1], [0, 0, 1, 1], [], []>} : vector<32x128xf32>, vector<128x128xf32>, vector<32x128xf32> -> vector<32x128xf32>
      %40 = arith.addf %39, %38 : vector<32x128xf32>
      %41 = math.tanh %40 : vector<32x128xf32>
      %42 = arith.addi %10, %c2_i32 : i32
      %43 = vector.broadcast %42 : i32 to vector<32x1xi32>
      %44 = arith.cmpi slt, %43, %9 : vector<32x1xi32>
      %45 = vector.shape_cast %44 : vector<32x1xi1> to vector<32x1xi1>
      %46 = vector.broadcast %45 : vector<32x1xi1> to vector<32x128xi1>
      %47 = arith.select %46, %41, %35 : vector<32x128xi1>, vector<32x128xf32>
      %c3_i32 = arith.constant 3 : i32
      %48 = arith.index_cast %c3_i32 : i32 to index
      %c0_16 = arith.constant 0 : index
      %c0_17 = arith.constant 0 : index
      %49 = vector.load %arg4[%48, %c0_16, %c0_17] : memref<4x32x128xf32, #tpu.memory_space<vmem>>, vector<1x32x128xf32>
      %50 = vector.shape_cast %49 : vector<1x32x128xf32> to vector<32x128xf32>
      %cst_18 = arith.constant dense<0.000000e+00> : vector<32x128xf32>
      %51 = tpu.matmul %47, %8, %cst_18 {dimension_numbers = #tpu.dot_dimension_numbers<[1], [0], [0], [1], [0, 0, 1, 1], [], []>} : vector<32x128xf32>, vector<128x128xf32>, vector<32x128xf32> -> vector<32x128xf32>
      %52 = arith.addf %51, %50 : vector<32x128xf32>
      %53 = math.tanh %52 : vector<32x128xf32>
      %54 = arith.addi %10, %c3_i32 : i32
      %55 = vector.broadcast %54 : i32 to vector<32x1xi32>
      %56 = arith.cmpi slt, %55, %9 : vector<32x1xi32>
      %57 = vector.shape_cast %56 : vector<32x1xi1> to vector<32x1xi1>
      %58 = vector.broadcast %57 : vector<32x1xi1> to vector<32x128xi1>
      %59 = arith.select %58, %53, %47 : vector<32x128xi1>, vector<32x128xf32>
      %c4_i32_19 = arith.constant 4 : i32
      %c0_20 = arith.constant 0 : index
      %c0_21 = arith.constant 0 : index
      %60 = vector.load %arg7[%c0_20, %c0_21] : memref<32x128xf32, #tpu.memory_space<vmem>>, vector<32x128xf32>
      tpu.vector_store %arg7[%c0_20, %c0_21], %59 {strides = array<i32>} : memref<32x128xf32, #tpu.memory_space<vmem>>, vector<32x128xf32>,
    } else {
    }
    return
  }
  func.func @transform_0(%arg0: i32, %arg1: i32, %arg2: memref<1x3xi32, #tpu.memory_space<smem>>, %arg3: memref<1xi32, #tpu.memory_space<smem>>) -> (i32, i32, i32) {
    %0 = arith.index_cast %arg0 : i32 to index
    %1 = arith.index_cast %arg1 : i32 to index
    %2 = memref.load %arg2[%0, %1] : memref<1x3xi32, #tpu.memory_space<smem>>
    %c0_i32 = arith.constant 0 : i32
    %c0_i32_0 = arith.constant 0 : i32
    return %2, %arg0, %c0_i32 : i32, i32, i32
  }
  func.func @transform_1(%arg0: i32, %arg1: i32, %arg2: memref<1x3xi32, #tpu.memory_space<smem>>, %arg3: memref<1xi32, #tpu.memory_space<smem>>) -> (i32, i32) {
    %c0_i32 = arith.constant 0 : i32
    %c0_i32_0 = arith.constant 0 : i32
    return %arg0, %c0_i32 : i32, i32
  }
  func.func @transform_2(%arg0: i32, %arg1: i32, %arg2: memref<1x3xi32, #tpu.memory_space<smem>>, %arg3: memref<1xi32, #tpu.memory_space<smem>>) -> (i32, i32) {
    %c0_i32 = arith.constant 0 : i32
    %c0_i32_0 = arith.constant 0 : i32
    %c0_i32_1 = arith.constant 0 : i32
    return %c0_i32, %c0_i32_0 : i32, i32
  }
  func.func @transform_3(%arg0: i32, %arg1: i32, %arg2: memref<1x3xi32, #tpu.memory_space<smem>>, %arg3: memref<1xi32, #tpu.memory_space<smem>>) -> (i32, i32) {
    %c0_i32 = arith.constant 0 : i32
    %c0_i32_0 = arith.constant 0 : i32
    return %arg0, %c0_i32 : i32, i32
  }
}

</mosaic_0001>

<llo_original>
// kernel: tpu_custom_call.1
$region0: #{tpu_custom_call.1}
  #allocation0 [shape = 'u32[]', space=smem, size = 0x4, offset = 0x4, fixed_abs, tag = 'smem constant byte address 0x4 - core index']
  #allocation1 [shape = 'u32[144,128]{1,0:T(1,128)}', space=vmem, size = 0x12000, scoped, tag = 'internal scratch']
  #allocation2 [shape = 's32[1]{0}', space=sflag, size = 0x4, scoped, tag = 'scoped memory for tpu_custom_call.1']
  #allocation3 [shape = 'u8[512]{0}', space=smem, size = 0x200, scoped, tag = 'prefetched SMEM operand 0']
  #allocation4 [shape = 's32[1]{0:T(128)S(6)}', space=smem, size = 0x200, scoped, tag = 'prefetched SMEM operand 1']
  %s0 = inlined_call_operand.vmem [shape: s32[1,3], index: 0, kind: input, shape index: {}]
  %s1 = inlined_call_operand.<no memory space> [shape: s32[1], index: 1, kind: input, shape index: {}]
  %s2 = inlined_call_operand.hbm [shape: f32[12,32,128], index: 2, kind: input, shape index: {}]
  %s3 = inlined_call_operand.vmem [shape: s32[32,1], index: 3, kind: input, shape index: {}]
  %s4 = inlined_call_operand.hbm [shape: f32[128,128], index: 4, kind: input, shape index: {}]
  %s5 = inlined_call_operand.hbm [shape: f32[32,128], index: 5, kind: output, shape index: {}]
  %s6 = sld [smem:[#allocation0]]
  $region61: #{tpu_custom_call.1} parent=0
    _
  %s8 = ssub.s32 1, %s6
  %s9 = scalar_select 0, %s8, %s6
  %s10 = sshll.u32 %s0, 4
  %s11 = int_to_ptr.vmem [resolvable:$true] %s10
  %13 = dma.vmem_to_smem %s11, 16, [#allocation3], [#allocation2]
  %14 = sst [smem:[#allocation4]] %s1
  %15 = dma.done [#allocation2], 16
  %16 = sfence
  $region1: #{tpu_custom_call.1} parent=0
    #allocation5 [shape = 'u8[131072]{0}', space=vmem, size = 0x20000, scoped, tag = 'input window, operand 2']
    #allocation6 [shape = 's32[2]{0}', space=sflag, size = 0x8, scoped, tag = 'scoped memory for tpu_custom_call.1']
    #allocation7 [shape = 's32[2]{0}', space=sflag, size = 0x8, scoped, tag = 'scoped memory for tpu_custom_call.1']
    #allocation8 [shape = 'u8[65536]{0}', space=vmem, size = 0x10000, scoped, tag = 'input window, operand 4, single buffered']
    #allocation9 [shape = 's32[1]{0}', space=sflag, size = 0x4, scoped, tag = 'scoped memory for tpu_custom_call.1']
    #allocation10 [shape = 'u8[16384]{0}', space=vmem, size = 0x4000, scoped, tag = 'output window, operand 0, single buffered']
    %17 = vsyncpa [#allocation6], 0
    %s18 = scalar_lea.sflag [#allocation6], 1
    %19 = vsyncpa %s18, 0
    %20 = vsyncpa [#allocation9], 0
    %21 = vsyncpa [#allocation7], 0
    loop: start=0, step=1, limit=5
    $region2: #{tpu_custom_call.1} parent=1 // loop_pre_header
      _
    $region3: #{tpu_custom_call.1} parent=1 // loop_header
      %s23 = sphi 0, %s27
      %p24 = scmp.ge.s32.totalorder %s23, 5
      %s30 = sphi 0, %s42
      %s31 = sphi 0, %s38
      %s32 = sphi 0, %s30
      %s33 = sphi 0, %s31
      %s34 = sphi 0, %s32
      %s35 = sphi 0, %s33
      %s63 = sphi 0, %s65
      %s66 = sphi 0, %s63
      %s67 = sphi 0, %s66
      %s83 = sphi 0, %s67
      %s89 = sphi 0, %s91
      %s92 = sphi 0, %s89
      %s93 = sphi 0, %s92
      %s109 = sphi 0, %s93
      %s113 = sphi 0, %s113
      %s115 = sphi 0, %s113
      %s116 = sphi 0, %s115
      %s130 = sphi 0, %s116
      %s136 = sphi 0, %s138
      %s139 = sphi 0, %s136
      %s140 = sphi 0, %s139
      %s156 = sphi 0, %s140
    $region4: #{tpu_custom_call.1} parent=1 // loop_header_branch
      %26 = sbr.rel (%p24) target = $region8
    $region5: #{tpu_custom_call.1} parent=1 // loop_body
      %s28 = ssub.s32 %s23, 1
      %s29 = ssub.s32 %s23, 2
      %s36 = sadd.s32 1, %s31
      %p37 = scmp.ge.s32.totalorder %s36, 3
      %s38 = scalar_select %p37, 0, %s36
      %s39 = sadd.s32 1, %s30
      %s40 = scalar_select %p37, %s39, %s30
      %p41 = scmp.ge.s32.totalorder %s40, 1
      %s42 = scalar_select %p41, 0, %s40
      %s43 = sshra.s32 %s31, 7
      %s44 = sand.u32 %s31, 127
      %s45 = sadd.s32 %s43, %s30
      %s46 = smul.u32 %s45, 128
      %s47 = sshra.s32 %s31, 7
      %s48 = sand.u32 %s31, 127
      %s49 = sadd.s32 %s46, %s48
      %s50 = sld [smem:[#allocation3 + %s49]]
      %s51 = sshra.s32 %s38, 7
      %s52 = sand.u32 %s38, 127
      %s53 = sadd.s32 %s51, %s42
      %s54 = smul.u32 %s53, 128
      %s55 = sshra.s32 %s38, 7
      %s56 = sand.u32 %s38, 127
      %s57 = sadd.s32 %s54, %s56
      %s58 = sld [smem:[#allocation3 + %s57]]
      %s59 = ssub.s32 %s50, %s58
      %s60 = ssub.s32 %s30, %s42
      %s61 = sor.u32 %s59, %s60
      %p62 = scmp.eq.s32.totalorder %s61, 0
      %s64 = sadd.s32 %s63, 1
      %s65 = scalar_select %p62, %s63, %s64
      %p68 = pneg %p62
      %p69 = scmp.eq.s32.totalorder %s23, 2
      %p70 = por %p68, %p69
      %p71 = scmp.ne.s32.totalorder %s63, %s66
      %p72 = scmp.eq.s32.totalorder %s23, 0
      %p73 = por %p71, %p72
      %p74 = scmp.ne.s32.totalorder %s63, %s66
      %p75 = scmp.eq.s32.totalorder %s28, 2
      %p76 = por %p74, %p75
      %p77 = scmp.ne.s32.totalorder %s66, %s67
      %p78 = scmp.eq.s32.totalorder %s28, 0
      %p79 = por %p77, %p78
      %p80 = scmp.ne.s32.totalorder %s66, %s67
      %p81 = scmp.eq.s32.totalorder %s29, 2
      %p82 = por %p80, %p81
      %p84 = scmp.ne.s32.totalorder %s67, %s83
      %p85 = scmp.eq.s32.totalorder %s29, 0
      %p86 = por %p84, %p85
      %s87 = ssub.s32 %s30, %s42
      %p88 = scmp.eq.s32.totalorder %s87, 0
      %s90 = sadd.s32 %s89, 1
      %s91 = scalar_select %p88, %s89, %s90
      %p94 = pneg %p88
      %p95 = scmp.eq.s32.totalorder %s23, 2
      %p96 = por %p94, %p95
      %p97 = scmp.ne.s32.totalorder %s89, %s92
      %p98 = scmp.eq.s32.totalorder %s23, 0
      %p99 = por %p97, %p98
      %p100 = scmp.ne.s32.totalorder %s89, %s92
      %p101 = scmp.eq.s32.totalorder %s28, 2
      %p102 = por %p100, %p101
      %p103 = scmp.ne.s32.totalorder %s92, %s93
      %p104 = scmp.eq.s32.totalorder %s28, 0
      %p105 = por %p103, %p104
      %p106 = scmp.ne.s32.totalorder %s92, %s93
      %p107 = scmp.eq.s32.totalorder %s29, 2
      %p108 = por %p106, %p107
      %p110 = scmp.ne.s32.totalorder %s93, %s109
      %p111 = scmp.eq.s32.totalorder %s29, 0
      %p112 = por %p110, %p111
      %s114 = sadd.s32 %s113, 1
      %p117 = scmp.eq.s32.totalorder %s23, 2
      %p118 = scmp.ne.s32.totalorder %s113, %s115
      %p119 = scmp.eq.s32.totalorder %s23, 0
      %p120 = por %p118, %p119
      %p121 = scmp.ne.s32.totalorder %s113, %s115
      %p122 = scmp.eq.s32.totalorder %s28, 2
      %p123 = por %p121, %p122
      %p124 = scmp.ne.s32.totalorder %s115, %s116
      %p125 = scmp.eq.s32.totalorder %s28, 0
      %p126 = por %p124, %p125
      %p127 = scmp.ne.s32.totalorder %s115, %s116
      %p128 = scmp.eq.s32.totalorder %s29, 2
      %p129 = por %p127, %p128
      %p131 = scmp.ne.s32.totalorder %s116, %s130
      %p132 = scmp.eq.s32.totalorder %s29, 0
      %p133 = por %p131, %p132
      %s134 = ssub.s32 %s30, %s42
      %p135 = scmp.eq.s32.totalorder %s134, 0
      %s137 = sadd.s32 %s136, 1
      %s138 = scalar_select %p135, %s136, %s137
      %p141 = pneg %p135
      %p142 = scmp.eq.s32.totalorder %s23, 2
      %p143 = por %p141, %p142
      %p144 = scmp.ne.s32.totalorder %s136, %s139
      %p145 = scmp.eq.s32.totalorder %s23, 0
      %p146 = por %p144, %p145
      %p147 = scmp.ne.s32.totalorder %s136, %s139
      %p148 = scmp.eq.s32.totalorder %s28, 2
      %p149 = por %p147, %p148
      %p150 = scmp.ne.s32.totalorder %s139, %s140
      %p151 = scmp.eq.s32.totalorder %s28, 0
      %p152 = por %p150, %p151
      %p153 = scmp.ne.s32.totalorder %s139, %s140
      %p154 = scmp.eq.s32.totalorder %s29, 2
      %p155 = por %p153, %p154
      %p157 = scmp.ne.s32.totalorder %s140, %s156
      %p158 = scmp.eq.s32.totalorder %s29, 0
      %p159 = por %p157, %p158
      %p160 = scmp.le.s32.totalorder 1, %s23
      %p161 = scmp.lt.s32.totalorder %s23, 4
      %p162 = pnand %p160, %p161
      %p163 = pneg %p162
      // Predicated region
      $region9: #{tpu_custom_call.1} parent=5 // pred_check
        _
      $region10: #{tpu_custom_call.1} parent=5 // pred_check_branch
        %165 = sbr.rel (%p162) target = $region12
      $region11: #{tpu_custom_call.1} parent=5 // pred_region
        %s166 = ssub.s32 %s23, 1
        // Predicated region
        $region13: #{tpu_custom_call.1} parent=11 // pred_check
          %p167 = pneg %p105
        $region14: #{tpu_custom_call.1} parent=11 // pred_check_branch
          %169 = sbr.rel (%p167) target = $region16
        $region15: #{tpu_custom_call.1} parent=11 // pred_region
          %s170 = smul.u32 4, %s32
          %p171 = scmp.lt.s32.totalorder %s170, 3
          %s172 = scalar_select %p171, %s170, 3
          %s173 = smul.addr %s172, 8
          %s174 = scalar_lea.vmem %s3, %s173
          %s175 = smul.u32 4, %s32
        $region16: #{tpu_custom_call.1} parent=11 // pred_fallthru
          _
        // Predicated region
        $region17: #{tpu_custom_call.1} parent=11 // pred_check
          %p176 = pneg %p126
        $region18: #{tpu_custom_call.1} parent=11 // pred_check_branch
          %178 = sbr.rel (%p176) target = $region20
        $region19: #{tpu_custom_call.1} parent=11 // pred_region
          %s180 = ssub.s32 2048, 2048
          %181 = vsyncadd [#allocation9], %s180
          %s182 = sshll.u32 [#allocation8], 4
          %s183 = int_to_ptr.vmem [resolvable:$true] %s182
          %188 = dma.hbm_to_vmem [thread:$0]  %s4, 2048, %s183, [#allocation9], 128, 128, 8
        $region20: #{tpu_custom_call.1} parent=11 // pred_fallthru
          _
      $region12: #{tpu_custom_call.1} parent=5 // pred_fallthru
        _
      %p189 = scmp.lt.s32.totalorder %s23, 3
      // Predicated region
      $region21: #{tpu_custom_call.1} parent=5 // pred_check
        %p190 = pneg %p189
      $region22: #{tpu_custom_call.1} parent=5 // pred_check_branch
        %192 = sbr.rel (%p190) target = $region24
      $region23: #{tpu_custom_call.1} parent=5 // pred_region
        // Predicated region
        $region25: #{tpu_custom_call.1} parent=23 // pred_check
          %p193 = pneg %p73
        $region26: #{tpu_custom_call.1} parent=23 // pred_check_branch
          %195 = sbr.rel (%p193) target = $region28
        $region27: #{tpu_custom_call.1} parent=23 // pred_region
          %s196 = sand.u32 %s63, 1
          %s197 = scalar_lea.sflag [#allocation6], %s196
          %s198 = sand.u32 %s63, 1
          %s199 = smul.addr %s198, 128
          %s200 = scalar_lea.vmem [#allocation5], %s199
          %s201 = sshra.s32 %s31, 7
          %s202 = sand.u32 %s31, 127
          %s203 = sadd.s32 %s201, %s30
          %s204 = smul.u32 %s203, 128
          %s205 = sshra.s32 %s31, 7
          %s206 = sand.u32 %s31, 127
          %s207 = sadd.s32 %s204, %s206
          %s208 = sld [smem:[#allocation3 + %s207]]
          %s209 = smul.u32 4, %s208
          %s210 = smul.u32 4, %s30
          %s212 = ssub.s32 2048, 2048
          %213 = vsyncadd %s197, %s212
          %s214 = smul.addr %s209, 4
          %s215 = sadd.s32 %s210, %s214
          %s216 = smul.addr %s215, 128
          %s217 = scalar_lea.hbm %s2, %s216
          %s218 = sshll.u32 %s200, 4
          %s219 = int_to_ptr.vmem [resolvable:$true] %s218
          %224 = dma.hbm_to_vmem [thread:$0]  %s217, 2048, %s219, %s197, 128, 128, 8
        $region28: #{tpu_custom_call.1} parent=23 // pred_fallthru
          _
      $region24: #{tpu_custom_call.1} parent=5 // pred_fallthru
        _
      %p225 = scmp.le.s32.totalorder 1, %s23
      %p226 = scmp.lt.s32.totalorder %s23, 4
      %p227 = pnand %p225, %p226
      %p228 = pneg %p227
      // Predicated region
      $region29: #{tpu_custom_call.1} parent=5 // pred_check
        _
      $region30: #{tpu_custom_call.1} parent=5 // pred_check_branch
        %230 = sbr.rel (%p227) target = $region32
      $region31: #{tpu_custom_call.1} parent=5 // pred_region
        %s231 = ssub.s32 %s23, 1
        %s232 = sand.u32 %s66, 1
        %s233 = scalar_lea.sflag [#allocation6], %s232
        %s234 = sand.u32 %s66, 1
        %s235 = smul.addr %s234, 128
        %s236 = scalar_lea.vmem [#allocation5], %s235
        // Predicated region
        $region33: #{tpu_custom_call.1} parent=31 // pred_check
          %p237 = pneg %p79
        $region34: #{tpu_custom_call.1} parent=31 // pred_check_branch
          %239 = sbr.rel (%p237) target = $region36
        $region35: #{tpu_custom_call.1} parent=31 // pred_region
          %240 = dma.done %s233, 2048
        $region36: #{tpu_custom_call.1} parent=31 // pred_fallthru
          _
        // Predicated region
        $region37: #{tpu_custom_call.1} parent=31 // pred_check
          %p241 = pneg %p126
        $region38: #{tpu_custom_call.1} parent=31 // pred_check_branch
          %243 = sbr.rel (%p241) target = $region40
        $region39: #{tpu_custom_call.1} parent=31 // pred_region
          %244 = dma.done [#allocation9], 2048
        $region40: #{tpu_custom_call.1} parent=31 // pred_fallthru
          _
        %s245 = sand.u32 %s66, 1
        %s246 = scalar_lea.sflag [#allocation6], %s245
        %s247 = sand.u32 %s66, 1
        %s248 = smul.addr %s247, 128
        %s249 = scalar_lea.vmem [#allocation5], %s248
        %p250 = pneg %p79
        %p251 = pneg %p76
        %s252 = smul.u32 4, %s32
        %p253 = scmp.lt.s32.totalorder %s252, 3
        %s254 = scalar_select %p253, %s252, 3
        %s255 = smul.addr %s254, 8
        %s256 = scalar_lea.vmem %s3, %s255
        %p257 = pneg %p105
        %p258 = pneg %p102
        %p259 = pneg %p126
        %p260 = pneg %p123
        %p261 = pneg %p152
        %p262 = pneg %p149
        %s263 = sshra.s32 %s33, 7
        %s264 = sand.u32 %s33, 127
        %s265 = sadd.s32 %s263, %s32
        %s266 = smul.u32 %s265, 128
        %s267 = sshra.s32 %s33, 7
        %s268 = sand.u32 %s33, 127
        %s269 = sadd.s32 %s266, %s268
        %s270 = sld [smem:[#allocation3 + %s269]]
        %s271 = smul.u32 4, %s270
        %s272 = smul.u32 4, %s32
        %s273 = smul.u32 4, %s32
        %p274 = scmp.lt.s32.totalorder %s273, 3
        %s275 = scalar_select %p274, %s273, 3
        %s276 = smul.addr %s275, 8
        %s277 = scalar_lea.vmem %s3, %s276
        %s278 = smul.u32 4, %s32
        %s279 = smul.u32 4, %s32
        %p280 = scmp.eq.s32.totalorder %s33, 0
        // Predicated region
        $region41: #{tpu_custom_call.1} parent=31 // pred_check
          %p281 = pneg %p280
        $region42: #{tpu_custom_call.1} parent=31 // pred_check_branch
          %283 = sbr.rel (%p281) target = $region44
        $region43: #{tpu_custom_call.1} parent=31 // pred_region
          %284 = vst [vmem:[#allocation10] sm:$0xff] 0.0
          %285 = vst [vmem:[#allocation10 + $0x8] sm:$0xff] 0.0
          %286 = vst [vmem:[#allocation10 + $0x10] sm:$0xff] 0.0
          %287 = vst [vmem:[#allocation10 + $0x18] sm:$0xff] 0.0
        $region44: #{tpu_custom_call.1} parent=31 // pred_fallthru
          _
        %s288 = sld [smem:[#allocation4 + %s32]]
        %p289 = scmp.lt.s32.totalorder %s33, %s288
        // Predicated region
        $region45: #{tpu_custom_call.1} parent=31 // pred_check
          %p290 = pneg %p289
        $region46: #{tpu_custom_call.1} parent=31 // pred_check_branch
          %292 = sbr.rel (%p290) target = $region48
        $region47: #{tpu_custom_call.1} parent=31 // pred_region
          %v293 = vld [vmem:[#allocation8] sm:$0xff]
          %v294 = vld [vmem:[#allocation8 + $0x8] sm:$0xff]
          %v295 = vld [vmem:[#allocation8 + $0x10] sm:$0xff]
          %v296 = vld [vmem:[#allocation8 + $0x18] sm:$0xff]
          %v297 = vld [vmem:[#allocation8 + $0x20] sm:$0xff]
          %v298 = vld [vmem:[#allocation8 + $0x28] sm:$0xff]
          %v299 = vld [vmem:[#allocation8 + $0x30] sm:$0xff]
          %v300 = vld [vmem:[#allocation8 + $0x38] sm:$0xff]
          %v301 = vld [vmem:[#allocation8 + $0x40] sm:$0xff]
          %v302 = vld [vmem:[#allocation8 + $0x48] sm:$0xff]
          %v303 = vld [vmem:[#allocation8 + $0x50] sm:$0xff]
          %v304 = vld [vmem:[#allocation8 + $0x58] sm:$0xff]
          %v305 = vld [vmem:[#allocation8 + $0x60] sm:$0xff]
          %v306 = vld [vmem:[#allocation8 + $0x68] sm:$0xff]
          %v307 = vld [vmem:[#allocation8 + $0x70] sm:$0xff]
          %v308 = vld [vmem:[#allocation8 + $0x78] sm:$0xff]
          %v309 = vld [vmem:[%s277] sm:$0xff]
          %v310 = vld [vmem:[%s277 + $0x8] sm:$0xff]
          %v311 = vld [vmem:[%s277 + $0x10] sm:$0xff]
          %v312 = vld [vmem:[%s277 + $0x18] sm:$0xff]
          %s313 = smul.u32 %s33, 4
          %v314 = vld [vmem:[#allocation10] sm:$0xff]
          %v315 = vld [vmem:[#allocation10 + $0x8] sm:$0xff]
          %v316 = vld [vmem:[#allocation10 + $0x10] sm:$0xff]
          %v317 = vld [vmem:[#allocation10 + $0x18] sm:$0xff]
          %v318 = vld [vmem:[%s236] sm:$0xff]
          %v319 = vld [vmem:[%s236 + $0x8] sm:$0xff]
          %v320 = vld [vmem:[%s236 + $0x10] sm:$0xff]
          %v321 = vld [vmem:[%s236 + $0x18] sm:$0xff]
          %322 = vmatprep.subr.mxu0 0.0
          %323 = vmatpush1.msra.mxu0 %v293
          %324 = vmatprep.subr.mxu0 0.0
          %325 = vmatpush1.msra.mxu0 %v294
          %326 = vmatprep.subr.mxu0 0.0
          %327 = vmatpush1.msra.mxu0 %v295
          %328 = vmatprep.subr.mxu0 0.0
          %329 = vmatpush1.msra.mxu0 %v296
          %330 = vmatprep.subr.mxu0 0.0
          %331 = vmatpush1.msra.mxu0 %v297
          %332 = vmatprep.subr.mxu0 0.0
          %333 = vmatpush1.msra.mxu0 %v298
          %334 = vmatprep.subr.mxu0 0.0
          %335 = vmatpush1.msra.mxu0 %v299
          %336 = vmatprep.subr.mxu0 0.0
          %337 = vmatpush1.msra.mxu0 %v300
          %338 = vmatprep.subr.mxu0 0.0
          %339 = vmatpush1.msra.mxu0 %v301
          %340 = vmatprep.subr.mxu0 0.0
          %341 = vmatpush1.msra.mxu0 %v302
          %342 = vmatprep.subr.mxu0 0.0
          %343 = vmatpush1.msra.mxu0 %v303
          %344 = vmatprep.subr.mxu0 0.0
          %345 = vmatpush1.msra.mxu0 %v304
          %346 = vmatprep.subr.mxu0 0.0
          %347 = vmatpush1.msra.mxu0 %v305
          %348 = vmatprep.subr.mxu0 0.0
          %349 = vmatpush1.msra.mxu0 %v306
          %350 = vmatprep.subr.mxu0 0.0
          %351 = vmatpush1.msra.mxu0 %v307
          %352 = vmatprep.subr.mxu0 0.0
          %353 = vmatpush1.msra.mxu0 %v308
          %354 = vmatprep.subr.mxu0 0.0
          %355 = vmatpush1.msra.mxu0 0.0
          %356 = vmatprep.subr.mxu0 0.0
          %357 = vmatpush1.msra.mxu0 0.0
          %358 = vmatprep.subr.mxu0 0.0
          %359 = vmatpush1.msra.mxu0 0.0
          %360 = vmatprep.subr.mxu0 0.0
          %361 = vmatpush1.msra.mxu0 0.0
          %362 = vmatprep.subr.mxu0 0.0
          %363 = vmatpush1.msra.mxu0 0.0
          %364 = vmatprep.subr.mxu0 0.0
          %365 = vmatpush1.msra.mxu0 0.0
          %366 = vmatprep.subr.mxu0 0.0
          %367 = vmatpush1.msra.mxu0 0.0
          %368 = vmatprep.subr.mxu0 0.0
          %369 = vmatpush1.msra.mxu0 0.0
          %370 = vmatprep.subr.mxu0 0.0
          %371 = vmatpush1.msra.mxu0 0.0
          %372 = vmatprep.subr.mxu0 0.0
          %373 = vmatpush1.msra.mxu0 0.0
          %374 = vmatprep.subr.mxu0 0.0
          %375 = vmatpush1.msra.mxu0 0.0
          %376 = vmatprep.subr.mxu0 0.0
          %377 = vmatpush1.msra.mxu0 0.0
          %378 = vmatprep.subr.mxu0 0.0
          %379 = vmatpush1.msra.mxu0 0.0
          %380 = vmatprep.subr.mxu0 0.0
          %381 = vmatpush1.msra.mxu0 0.0
          %382 = vmatprep.subr.mxu0 0.0
          %383 = vmatpush1.msra.mxu0 0.0
          %384 = vmatprep.subr.mxu0 0.0
          %385 = vmatpush1.msra.mxu0 0.0
          %386 = vmatprep.mubr.f32.mxu0 0.0
          %387 = vmatmul.mubr.f32.gmra.mrb[0].mxu0 %v314
          %v388 = vpop.f32.mrb[0].mxu0
          %v389 = vadd.f32 %v318, %v388
          %v390 = vpop.f32.mrb[0].mxu0
          %391 = vmatprep.mubr.f32.mxu0 0.0
          %392 = vmatmul.mubr.f32.gmra.mrb[0].mxu0 %v315
          %v393 = vpop.f32.mrb[0].mxu0
          %v394 = vadd.f32 %v319, %v393
          %v395 = vpop.f32.mrb[0].mxu0
          %396 = vmatprep.mubr.f32.mxu0 0.0
          %397 = vmatmul.mubr.f32.gmra.mrb[0].mxu0 %v316
          %v398 = vpop.f32.mrb[0].mxu0
          %v399 = vadd.f32 %v320, %v398
          %v400 = vpop.f32.mrb[0].mxu0
          %401 = vmatprep.mubr.f32.mxu0 0.0
          %402 = vmatmul.mubr.f32.gmra.mrb[0].mxu0 %v317
          %v403 = vpop.f32.mrb[0].mxu0
          %v404 = vadd.f32 %v321, %v403
          %v405 = vpop.f32.mrb[0].mxu0
          %406 = vdwg.mxu0
          %v407 = vtanh.pop %v389
          %v408 = vtanh.pop %v394
          %v409 = vtanh.pop %v399
          %v410 = vtanh.pop %v404
          %v411 = vstv %s313
          %vm412 = vcmp.lt.s32.totalorder %v411, %v309
          %vm413 = vcmp.lt.s32.totalorder %v411, %v310
          %vm414 = vcmp.lt.s32.totalorder %v411, %v311
          %vm415 = vcmp.lt.s32.totalorder %v411, %v312
          %v416 = vsel %vm412, 1, 0
          %v417 = vsel %vm413, 1, 0
          %v418 = vsel %vm414, 1, 0
          %v419 = vsel %vm415, 1, 0
          %420 = vset.pattern.permute.xlu0 0
          %421 = vperm.xlu0 %420, %v416
          %v422 = vpop.permute.xlu0 %421
          %423 = vset.pattern.permute.xlu0 0
          %424 = vperm.xlu0 %423, %v417
          %v425 = vpop.permute.xlu0 %424
          %426 = vset.pattern.permute.xlu0 0
          %427 = vperm.xlu0 %426, %v418
          %v428 = vpop.permute.xlu0 %427
          %429 = vset.pattern.permute.xlu0 0
          %430 = vperm.xlu0 %429, %v419
          %v431 = vpop.permute.xlu0 %430
          %vm432 = vcmp.eq.s32.totalorder %v422, 1
          %vm433 = vcmp.eq.s32.totalorder %v425, 1
          %vm434 = vcmp.eq.s32.totalorder %v428, 1
          %vm435 = vcmp.eq.s32.totalorder %v431, 1
          %v436 = vsel %vm432, %v407, %v314
          %v437 = vsel %vm433, %v408, %v315
          %v438 = vsel %vm434, %v409, %v316
          %v439 = vsel %vm435, %v410, %v317
          %s440 = scalar_lea.vmem %s236, 32 [#allocation5]
          %v441 = vld [vmem:[%s440] sm:$0xff]
          %v442 = vld [vmem:[%s440 + $0x8] sm:$0xff]
          %v443 = vld [vmem:[%s440 + $0x10] sm:$0xff]
          %v444 = vld [vmem:[%s440 + $0x18] sm:$0xff]
          %445 = vmatprep.subr.mxu0 0.0
          %446 = vmatpush1.msra.mxu0 %v293
          %447 = vmatprep.subr.mxu0 0.0
          %448 = vmatpush1.msra.mxu0 %v294
          %449 = vmatprep.subr.mxu0 0.0
          %450 = vmatpush1.msra.mxu0 %v295
          %451 = vmatprep.subr.mxu0 0.0
          %452 = vmatpush1.msra.mxu0 %v296
          %453 = vmatprep.subr.mxu0 0.0
          %454 = vmatpush1.msra.mxu0 %v297
          %455 = vmatprep.subr.mxu0 0.0
          %456 = vmatpush1.msra.mxu0 %v298
          %457 = vmatprep.subr.mxu0 0.0
          %458 = vmatpush1.msra.mxu0 %v299
          %459 = vmatprep.subr.mxu0 0.0
          %460 = vmatpush1.msra.mxu0 %v300
          %461 = vmatprep.subr.mxu0 0.0
          %462 = vmatpush1.msra.mxu0 %v301
          %463 = vmatprep.subr.mxu0 0.0
          %464 = vmatpush1.msra.mxu0 %v302
          %465 = vmatprep.subr.mxu0 0.0
          %466 = vmatpush1.msra.mxu0 %v303
          %467 = vmatprep.subr.mxu0 0.0
          %468 = vmatpush1.msra.mxu0 %v304
          %469 = vmatprep.subr.mxu0 0.0
          %470 = vmatpush1.msra.mxu0 %v305
          %471 = vmatprep.subr.mxu0 0.0
          %472 = vmatpush1.msra.mxu0 %v306
          %473 = vmatprep.subr.mxu0 0.0
          %474 = vmatpush1.msra.mxu0 %v307
          %475 = vmatprep.subr.mxu0 0.0
          %476 = vmatpush1.msra.mxu0 %v308
          %477 = vmatprep.subr.mxu0 0.0
          %478 = vmatpush1.msra.mxu0 0.0
          %479 = vmatprep.subr.mxu0 0.0
          %480 = vmatpush1.msra.mxu0 0.0
          %481 = vmatprep.subr.mxu0 0.0
          %482 = vmatpush1.msra.mxu0 0.0
          %483 = vmatprep.subr.mxu0 0.0
          %484 = vmatpush1.msra.mxu0 0.0
          %485 = vmatprep.subr.mxu0 0.0
          %486 = vmatpush1.msra.mxu0 0.0
          %487 = vmatprep.subr.mxu0 0.0
          %488 = vmatpush1.msra.mxu0 0.0
          %489 = vmatprep.subr.mxu0 0.0
          %490 = vmatpush1.msra.mxu0 0.0
          %491 = vmatprep.subr.mxu0 0.0
          %492 = vmatpush1.msra.mxu0 0.0
          %493 = vmatprep.subr.mxu0 0.0
          %494 = vmatpush1.msra.mxu0 0.0
          %495 = vmatprep.subr.mxu0 0.0
          %496 = vmatpush1.msra.mxu0 0.0
          %497 = vmatprep.subr.mxu0 0.0
          %498 = vmatpush1.msra.mxu0 0.0
          %499 = vmatprep.subr.mxu0 0.0
          %500 = vmatpush1.msra.mxu0 0.0
          %501 = vmatprep.subr.mxu0 0.0
          %502 = vmatpush1.msra.mxu0 0.0
          %503 = vmatprep.subr.mxu0 0.0
          %504 = vmatpush1.msra.mxu0 0.0
          %505 = vmatprep.subr.mxu0 0.0
          %506 = vmatpush1.msra.mxu0 0.0
          %507 = vmatprep.subr.mxu0 0.0
          %508 = vmatpush1.msra.mxu0 0.0
          %509 = vmatprep.mubr.f32.mxu0 0.0
          %510 = vmatmul.mubr.f32.gmra.mrb[0].mxu0 %v436
          %v511 = vpop.f32.mrb[0].mxu0
          %v512 = vadd.f32 %v441, %v511
          %v513 = vpop.f32.mrb[0].mxu0
          %514 = vmatprep.mubr.f32.mxu0 0.0
          %515 = vmatmul.mubr.f32.gmra.mrb[0].mxu0 %v437
          %v516 = vpop.f32.mrb[0].mxu0
          %v517 = vadd.f32 %v442, %v516
          %v518 = vpop.f32.mrb[0].mxu0
          %519 = vmatprep.mubr.f32.mxu0 0.0
          %520 = vmatmul.mubr.f32.gmra.mrb[0].mxu0 %v438
          %v521 = vpop.f32.mrb[0].mxu0
          %v522 = vadd.f32 %v443, %v521
          %v523 = vpop.f32.mrb[0].mxu0
          %524 = vmatprep.mubr.f32.mxu0 0.0
          %525 = vmatmul.mubr.f32.gmra.mrb[0].mxu0 %v439
          %v526 = vpop.f32.mrb[0].mxu0
          %v527 = vadd.f32 %v444, %v526
          %v528 = vpop.f32.mrb[0].mxu0
          %529 = vdwg.mxu0
          %v530 = vtanh.pop %v512
          %v531 = vtanh.pop %v517
          %v532 = vtanh.pop %v522
          %v533 = vtanh.pop %v527
          %s534 = sadd.s32 %s313, 1
          %v535 = vstv %s534
          %vm536 = vcmp.lt.s32.totalorder %v535, %v309
          %vm537 = vcmp.lt.s32.totalorder %v535, %v310
          %vm538 = vcmp.lt.s32.totalorder %v535, %v311
          %vm539 = vcmp.lt.s32.totalorder %v535, %v312
          %v540 = vsel %vm536, 1, 0
          %v541 = vsel %vm537, 1, 0
          %v542 = vsel %vm538, 1, 0
          %v543 = vsel %vm539, 1, 0
          %544 = vset.pattern.permute.xlu0 0
          %545 = vperm.xlu0 %544, %v540
          %v546 = vpop.permute.xlu0 %545
          %547 = vset.pattern.permute.xlu0 0
          %548 = vperm.xlu0 %547, %v541
          %v549 = vpop.permute.xlu0 %548
          %550 = vset.pattern.permute.xlu0 0
          %551 = vperm.xlu0 %550, %v542
          %v552 = vpop.permute.xlu0 %551
          %553 = vset.pattern.permute.xlu0 0
          %554 = vperm.xlu0 %553, %v543
          %v555 = vpop.permute.xlu0 %554
          %vm556 = vcmp.eq.s32.totalorder %v546, 1
          %vm557 = vcmp.eq.s32.totalorder %v549, 1
          %vm558 = vcmp.eq.s32.totalorder %v552, 1
          %vm559 = vcmp.eq.s32.totalorder %v555, 1
          %v560 = vsel %vm556, %v530, %v436
          %v561 = vsel %vm557, %v531, %v437
          %v562 = vsel %vm558, %v532, %v438
          %v563 = vsel %vm559, %v533, %v439
          %s564 = scalar_lea.vmem %s236, 64 [#allocation5]
          %v565 = vld [vmem:[%s564] sm:$0xff]
          %v566 = vld [vmem:[%s564 + $0x8] sm:$0xff]
          %v567 = vld [vmem:[%s564 + $0x10] sm:$0xff]
          %v568 = vld [vmem:[%s564 + $0x18] sm:$0xff]
          %569 = vmatprep.subr.mxu0 0.0
          %570 = vmatpush1.msra.mxu0 %v293
          %571 = vmatprep.subr.mxu0 0.0
          %572 = vmatpush1.msra.mxu0 %v294
          %573 = vmatprep.subr.mxu0 0.0
          %574 = vmatpush1.msra.mxu0 %v295
          %575 = vmatprep.subr.mxu0 0.0
          %576 = vmatpush1.msra.mxu0 %v296
          %577 = vmatprep.subr.mxu0 0.0
          %578 = vmatpush1.msra.mxu0 %v297
          %579 = vmatprep.subr.mxu0 0.0
          %580 = vmatpush1.msra.mxu0 %v298
          %581 = vmatprep.subr.mxu0 0.0
          %582 = vmatpush1.msra.mxu0 %v299
          %583 = vmatprep.subr.mxu0 0.0
          %584 = vmatpush1.msra.mxu0 %v300
          %585 = vmatprep.subr.mxu0 0.0
          %586 = vmatpush1.msra.mxu0 %v301
          %587 = vmatprep.subr.mxu0 0.0
          %588 = vmatpush1.msra.mxu0 %v302
          %589 = vmatprep.subr.mxu0 0.0
          %590 = vmatpush1.msra.mxu0 %v303
          %591 = vmatprep.subr.mxu0 0.0
          %592 = vmatpush1.msra.mxu0 %v304
          %593 = vmatprep.subr.mxu0 0.0
          %594 = vmatpush1.msra.mxu0 %v305
          %595 = vmatprep.subr.mxu0 0.0
          %596 = vmatpush1.msra.mxu0 %v306
          %597 = vmatprep.subr.mxu0 0.0
          %598 = vmatpush1.msra.mxu0 %v307
          %599 = vmatprep.subr.mxu0 0.0
          %600 = vmatpush1.msra.mxu0 %v308
          %601 = vmatprep.subr.mxu0 0.0
          %602 = vmatpush1.msra.mxu0 0.0
          %603 = vmatprep.subr.mxu0 0.0
          %604 = vmatpush1.msra.mxu0 0.0
          %605 = vmatprep.subr.mxu0 0.0
          %606 = vmatpush1.msra.mxu0 0.0
          %607 = vmatprep.subr.mxu0 0.0
          %608 = vmatpush1.msra.mxu0 0.0
          %609 = vmatprep.subr.mxu0 0.0
          %610 = vmatpush1.msra.mxu0 0.0
          %611 = vmatprep.subr.mxu0 0.0
          %612 = vmatpush1.msra.mxu0 0.0
          %613 = vmatprep.subr.mxu0 0.0
          %614 = vmatpush1.msra.mxu0 0.0
          %615 = vmatprep.subr.mxu0 0.0
          %616 = vmatpush1.msra.mxu0 0.0
          %617 = vmatprep.subr.mxu0 0.0
          %618 = vmatpush1.msra.mxu0 0.0
          %619 = vmatprep.subr.mxu0 0.0
          %620 = vmatpush1.msra.mxu0 0.0
          %621 = vmatprep.subr.mxu0 0.0
          %622 = vmatpush1.msra.mxu0 0.0
          %623 = vmatprep.subr.mxu0 0.0
          %624 = vmatpush1.msra.mxu0 0.0
          %625 = vmatprep.subr.mxu0 0.0
          %626 = vmatpush1.msra.mxu0 0.0
          %627 = vmatprep.subr.mxu0 0.0
          %628 = vmatpush1.msra.mxu0 0.0
          %629 = vmatprep.subr.mxu0 0.0
          %630 = vmatpush1.msra.mxu0 0.0
          %631 = vmatprep.subr.mxu0 0.0
          %632 = vmatpush1.msra.mxu0 0.0
          %633 = vmatprep.mubr.f32.mxu0 0.0
          %634 = vmatmul.mubr.f32.gmra.mrb[0].mxu0 %v560
          %v635 = vpop.f32.mrb[0].mxu0
          %v636 = vadd.f32 %v565, %v635
          %v637 = vpop.f32.mrb[0].mxu0
          %638 = vmatprep.mubr.f32.mxu0 0.0
          %639 = vmatmul.mubr.f32.gmra.mrb[0].mxu0 %v561
          %v640 = vpop.f32.mrb[0].mxu0
          %v641 = vadd.f32 %v566, %v640
          %v642 = vpop.f32.mrb[0].mxu0
          %643 = vmatprep.mubr.f32.mxu0 0.0
          %644 = vmatmul.mubr.f32.gmra.mrb[0].mxu0 %v562
          %v645 = vpop.f32.mrb[0].mxu0
          %v646 = vadd.f32 %v567, %v645
          %v647 = vpop.f32.mrb[0].mxu0
          %648 = vmatprep.mubr.f32.mxu0 0.0
          %649 = vmatmul.mubr.f32.gmra.mrb[0].mxu0 %v563
          %v650 = vpop.f32.mrb[0].mxu0
          %v651 = vadd.f32 %v568, %v650
          %v652 = vpop.f32.mrb[0].mxu0
          %653 = vdwg.mxu0
          %v654 = vtanh.pop %v636
          %v655 = vtanh.pop %v641
          %v656 = vtanh.pop %v646
          %v657 = vtanh.pop %v651
          %s658 = sadd.s32 %s313, 2
          %v659 = vstv %s658
          %vm660 = vcmp.lt.s32.totalorder %v659, %v309
          %vm661 = vcmp.lt.s32.totalorder %v659, %v310
          %vm662 = vcmp.lt.s32.totalorder %v659, %v311
          %vm663 = vcmp.lt.s32.totalorder %v659, %v312
          %v664 = vsel %vm660, 1, 0
          %v665 = vsel %vm661, 1, 0
          %v666 = vsel %vm662, 1, 0
          %v667 = vsel %vm663, 1, 0
          %668 = vset.pattern.permute.xlu0 0
          %669 = vperm.xlu0 %668, %v664
          %v670 = vpop.permute.xlu0 %669
          %671 = vset.pattern.permute.xlu0 0
          %672 = vperm.xlu0 %671, %v665
          %v673 = vpop.permute.xlu0 %672
          %674 = vset.pattern.permute.xlu0 0
          %675 = vperm.xlu0 %674, %v666
          %v676 = vpop.permute.xlu0 %675
          %677 = vset.pattern.permute.xlu0 0
          %678 = vperm.xlu0 %677, %v667
          %v679 = vpop.permute.xlu0 %678
          %vm680 = vcmp.eq.s32.totalorder %v670, 1
          %vm681 = vcmp.eq.s32.totalorder %v673, 1
          %vm682 = vcmp.eq.s32.totalorder %v676, 1
          %vm683 = vcmp.eq.s32.totalorder %v679, 1
          %v684 = vsel %vm680, %v654, %v560
          %v685 = vsel %vm681, %v655, %v561
          %v686 = vsel %vm682, %v656, %v562
          %v687 = vsel %vm683, %v657, %v563
          %s688 = scalar_lea.vmem %s236, 96 [#allocation5]
          %v689 = vld [vmem:[%s688] sm:$0xff]
          %v690 = vld [vmem:[%s688 + $0x8] sm:$0xff]
          %v691 = vld [vmem:[%s688 + $0x10] sm:$0xff]
          %v692 = vld [vmem:[%s688 + $0x18] sm:$0xff]
          %693 = vmatprep.subr.mxu0 0.0
          %694 = vmatpush1.msra.mxu0 %v293
          %695 = vmatprep.subr.mxu0 0.0
          %696 = vmatpush1.msra.mxu0 %v294
          %697 = vmatprep.subr.mxu0 0.0
          %698 = vmatpush1.msra.mxu0 %v295
          %699 = vmatprep.subr.mxu0 0.0
          %700 = vmatpush1.msra.mxu0 %v296
          %701 = vmatprep.subr.mxu0 0.0
          %702 = vmatpush1.msra.mxu0 %v297
          %703 = vmatprep.subr.mxu0 0.0
          %704 = vmatpush1.msra.mxu0 %v298
          %705 = vmatprep.subr.mxu0 0.0
          %706 = vmatpush1.msra.mxu0 %v299
          %707 = vmatprep.subr.mxu0 0.0
          %708 = vmatpush1.msra.mxu0 %v300
          %709 = vmatprep.subr.mxu0 0.0
          %710 = vmatpush1.msra.mxu0 %v301
          %711 = vmatprep.subr.mxu0 0.0
          %712 = vmatpush1.msra.mxu0 %v302
          %713 = vmatprep.subr.mxu0 0.0
          %714 = vmatpush1.msra.mxu0 %v303
          %715 = vmatprep.subr.mxu0 0.0
          %716 = vmatpush1.msra.mxu0 %v304
          %717 = vmatprep.subr.mxu0 0.0
          %718 = vmatpush1.msra.mxu0 %v305
          %719 = vmatprep.subr.mxu0 0.0
          %720 = vmatpush1.msra.mxu0 %v306
          %721 = vmatprep.subr.mxu0 0.0
          %722 = vmatpush1.msra.mxu0 %v307
          %723 = vmatprep.subr.mxu0 0.0
          %724 = vmatpush1.msra.mxu0 %v308
          %725 = vmatprep.subr.mxu0 0.0
          %726 = vmatpush1.msra.mxu0 0.0
          %727 = vmatprep.subr.mxu0 0.0
          %728 = vmatpush1.msra.mxu0 0.0
          %729 = vmatprep.subr.mxu0 0.0
          %730 = vmatpush1.msra.mxu0 0.0
          %731 = vmatprep.subr.mxu0 0.0
          %732 = vmatpush1.msra.mxu0 0.0
          %733 = vmatprep.subr.mxu0 0.0
          %734 = vmatpush1.msra.mxu0 0.0
          %735 = vmatprep.subr.mxu0 0.0
          %736 = vmatpush1.msra.mxu0 0.0
          %737 = vmatprep.subr.mxu0 0.0
          %738 = vmatpush1.msra.mxu0 0.0
          %739 = vmatprep.subr.mxu0 0.0
          %740 = vmatpush1.msra.mxu0 0.0
          %741 = vmatprep.subr.mxu0 0.0
          %742 = vmatpush1.msra.mxu0 0.0
          %743 = vmatprep.subr.mxu0 0.0
          %744 = vmatpush1.msra.mxu0 0.0
          %745 = vmatprep.subr.mxu0 0.0
          %746 = vmatpush1.msra.mxu0 0.0
          %747 = vmatprep.subr.mxu0 0.0
          %748 = vmatpush1.msra.mxu0 0.0
          %749 = vmatprep.subr.mxu0 0.0
          %750 = vmatpush1.msra.mxu0 0.0
          %751 = vmatprep.subr.mxu0 0.0
          %752 = vmatpush1.msra.mxu0 0.0
          %753 = vmatprep.subr.mxu0 0.0
          %754 = vmatpush1.msra.mxu0 0.0
          %755 = vmatprep.subr.mxu0 0.0
          %756 = vmatpush1.msra.mxu0 0.0
          %757 = vmatprep.mubr.f32.mxu0 0.0
          %758 = vmatmul.mubr.f32.gmra.mrb[0].mxu0 %v684
          %v759 = vpop.f32.mrb[0].mxu0
          %v760 = vadd.f32 %v689, %v759
          %v761 = vpop.f32.mrb[0].mxu0
          %762 = vmatprep.mubr.f32.mxu0 0.0
          %763 = vmatmul.mubr.f32.gmra.mrb[0].mxu0 %v685
          %v764 = vpop.f32.mrb[0].mxu0
          %v765 = vadd.f32 %v690, %v764
          %v766 = vpop.f32.mrb[0].mxu0
          %767 = vmatprep.mubr.f32.mxu0 0.0
          %768 = vmatmul.mubr.f32.gmra.mrb[0].mxu0 %v686
          %v769 = vpop.f32.mrb[0].mxu0
          %v770 = vadd.f32 %v691, %v769
          %v771 = vpop.f32.mrb[0].mxu0
          %772 = vmatprep.mubr.f32.mxu0 0.0
          %773 = vmatmul.mubr.f32.gmra.mrb[0].mxu0 %v687
          %v774 = vpop.f32.mrb[0].mxu0
          %v775 = vadd.f32 %v692, %v774
          %v776 = vpop.f32.mrb[0].mxu0
          %777 = vdwg.mxu0
          %v778 = vtanh.pop %v760
          %v779 = vtanh.pop %v765
          %v780 = vtanh.pop %v770
          %v781 = vtanh.pop %v775
          %s782 = sadd.s32 %s313, 3
          %v783 = vstv %s782
          %vm784 = vcmp.lt.s32.totalorder %v783, %v309
          %vm785 = vcmp.lt.s32.totalorder %v783, %v310
          %vm786 = vcmp.lt.s32.totalorder %v783, %v311
          %vm787 = vcmp.lt.s32.totalorder %v783, %v312
          %v788 = vsel %vm784, 1, 0
          %v789 = vsel %vm785, 1, 0
          %v790 = vsel %vm786, 1, 0
          %v791 = vsel %vm787, 1, 0
          %792 = vset.pattern.permute.xlu0 0
          %793 = vperm.xlu0 %792, %v788
          %v794 = vpop.permute.xlu0 %793
          %795 = vset.pattern.permute.xlu0 0
          %796 = vperm.xlu0 %795, %v789
          %v797 = vpop.permute.xlu0 %796
          %798 = vset.pattern.permute.xlu0 0
          %799 = vperm.xlu0 %798, %v790
          %v800 = vpop.permute.xlu0 %799
          %801 = vset.pattern.permute.xlu0 0
          %802 = vperm.xlu0 %801, %v791
          %v803 = vpop.permute.xlu0 %802
          %vm804 = vcmp.eq.s32.totalorder %v794, 1
          %vm805 = vcmp.eq.s32.totalorder %v797, 1
          %vm806 = vcmp.eq.s32.totalorder %v800, 1
          %vm807 = vcmp.eq.s32.totalorder %v803, 1
          %v808 = vsel %vm804, %v778, %v684
          %v809 = vsel %vm805, %v779, %v685
          %v810 = vsel %vm806, %v780, %v686
          %v811 = vsel %vm807, %v781, %v687
          %812 = vst [vmem:[#allocation10] sm:$0xff] %v808
          %813 = vst [vmem:[#allocation10 + $0x8] sm:$0xff] %v809
          %814 = vst [vmem:[#allocation10 + $0x10] sm:$0xff] %v810
          %815 = vst [vmem:[#allocation10 + $0x18] sm:$0xff] %v811
        $region48: #{tpu_custom_call.1} parent=31 // pred_fallthru
          _
        // Predicated region
        $region49: #{tpu_custom_call.1} parent=31 // pred_check
          %p816 = pneg %p149
        $region50: #{tpu_custom_call.1} parent=31 // pred_check_branch
          %818 = sbr.rel (%p816) target = $region52
        $region51: #{tpu_custom_call.1} parent=31 // pred_region
          %s819 = smul.u32 4, %s32
          %s821 = ssub.s32 512, 512
          %822 = vsyncadd [#allocation7], %s821
          %s823 = smul.addr %s819, 128
          %s824 = scalar_lea.hbm %s5, %s823
          %s825 = sshll.u32 [#allocation10], 4
          %s826 = int_to_ptr.vmem [resolvable:$true] %s825
          %831 = dma.vmem_to_hbm [thread:$0]  %s826, 512, %s824, [#allocation7], 128, 128, 8
        $region52: #{tpu_custom_call.1} parent=31 // pred_fallthru
          _
        // Predicated region
        $region53: #{tpu_custom_call.1} parent=31 // pred_check
          %p832 = pneg %p149
        $region54: #{tpu_custom_call.1} parent=31 // pred_check_branch
          %834 = sbr.rel (%p832) target = $region56
        $region55: #{tpu_custom_call.1} parent=31 // pred_region
          %835 = dma.done [#allocation7], 512
        $region56: #{tpu_custom_call.1} parent=31 // pred_fallthru
          _
      $region32: #{tpu_custom_call.1} parent=5 // pred_fallthru
        _
      %p836 = scmp.le.s32.totalorder 2, %s23
      // Predicated region
      $region57: #{tpu_custom_call.1} parent=5 // pred_check
        %p837 = pneg %p836
      $region58: #{tpu_custom_call.1} parent=5 // pred_check_branch
        %839 = sbr.rel (%p837) target = $region60
      $region59: #{tpu_custom_call.1} parent=5 // pred_region
        %s840 = ssub.s32 %s23, 2
      $region60: #{tpu_custom_call.1} parent=5 // pred_fallthru
        _
    $region6: #{tpu_custom_call.1} parent=1 // loop_footer
      %s27 = sadd.s32 1, %s23
    $region7: #{tpu_custom_call.1} parent=1 // loop_footer_branch
      %22 = sbr.rel target = $region3
    $region8: #{tpu_custom_call.1} parent=1 // loop_exit
      _
    %841 = vsyncpa [#allocation6], 1
    %s842 = scalar_lea.sflag [#allocation6], 1
    %843 = vsyncpa %s842, 1
    %844 = vsyncpa [#allocation9], 1
    %845 = vsyncpa [#allocation7], 1
    %s846 = scalar_lea.sflag [#allocation7], 1
    %847 = vsyncpa %s846, 1

</llo_original>
